<compile_context>
chip_gen: v7x
topology: tpu7x:2x2x1
jax: 0.10.0
libtpu: 0.0.40
codegen_flags: <defaults>
</compile_context>

<pallas_src>
import math
import functools

import jax
import jax.numpy as jnp
from jax.experimental import pallas as pl
from jax.experimental.pallas import tpu as pltpu


# ----------------------------------------------------------------------------
# Kernel 1: fused q/k/v projection   y_i = x_i @ W_t + b   (i in {q, k, v})
# One pallas_call, tiled over M = B*T; the shared weight block stays resident.
# ----------------------------------------------------------------------------
def _qkv_proj_kernel(xq_ref, xk_ref, xv_ref, w_ref, b_ref,
                     yq_ref, yk_ref, yv_ref, *, mxu_bf16):
    w = w_ref[...]                       # (E_in, E_out); bf16 if mxu_bf16
    b = b_ref[...]                       # (1, E_out) f32

    def project(x_ref, y_ref):
        x = x_ref[...]
        if mxu_bf16:
            x = x.astype(jnp.bfloat16)   # bf16 MXU operands, f32 accumulation
        acc = jnp.dot(x, w, preferred_element_type=jnp.float32)
        y_ref[...] = (acc + b).astype(y_ref.dtype)

    project(xq_ref, yq_ref)
    project(xk_ref, yk_ref)
    project(xv_ref, yv_ref)


def fused_qkv_projection(q, k, v, w_t, b_row, *, mxu_bf16, tile_m=512):
    """q/k/v: (B, T, E_in); w_t: (E_in, E_out) pre-transposed; b_row: (1, E_out)."""
    B, T, E_in = q.shape
    E_out = w_t.shape[1]
    M = B * T
    tm = M if M <= tile_m else tile_m          # full M if small, else 512-row tiles
    grid = (pl.cdiv(M, tm),)

    x_spec = pl.BlockSpec((tm, E_in), lambda i: (i, 0))
    y_spec = pl.BlockSpec((tm, E_out), lambda i: (i, 0))
    w_spec = pl.BlockSpec((E_in, E_out), lambda i: (0, 0))   # constant block
    b_spec = pl.BlockSpec((1, E_out), lambda i: (0, 0))

    outs = pl.pallas_call(
        functools.partial(_qkv_proj_kernel, mxu_bf16=mxu_bf16),
        grid=grid,
        in_specs=[x_spec, x_spec, x_spec, w_spec, b_spec],
        out_specs=(y_spec, y_spec, y_spec),
        out_shape=tuple(jax.ShapeDtypeStruct((M, E_out), jnp.float32)
                        for _ in range(3)),
        compiler_params=pltpu.CompilerParams(
            dimension_semantics=("parallel",)),
    )(q.reshape(M, E_in), k.reshape(M, E_in), v.reshape(M, E_in), w_t, b_row)
    return tuple(y.reshape(B, T, E_out) for y in outs)


# ----------------------------------------------------------------------------
# Kernel 2: multi-head scaled dot-product attention, one BATCH per grid step
# (all heads of the batch handled inside the step; lane-dense context output).
# ----------------------------------------------------------------------------
def _mha_kernel(q_ref, k_ref, v_ref, ctx_ref, attn_ref, *,
                scale, num_heads, head_dim, mxu_bf16):
    H, D = num_heads, head_dim
    # Static unroll over heads: each head is a pair of 2-D MXU matmuls plus an
    # f32 softmax. All heads share one grid step (amortizes per-step pipeline
    # overhead) and the context is assembled into a lane-dense (T, H*D) block.
    for h in range(H):
        q_h = q_ref[0, :, h, :] * scale            # (T, D); scale folded into q
        k_h = k_ref[0, :, h, :]                    # (T, D)
        v_h = v_ref[0, :, h, :]                    # (T, D)
        if mxu_bf16:
            q_h = q_h.astype(jnp.bfloat16)
            k_h = k_h.astype(jnp.bfloat16)

        # q @ k^T without materializing a transpose: contract the last dims.
        s = jax.lax.dot_general(
            q_h, k_h, (((1,), (1,)), ((), ())),
            preferred_element_type=jnp.float32)    # (T, T) f32 scores

        # Numerically-stable softmax, all vector math in f32.
        m = jnp.max(s, axis=-1, keepdims=True)
        p = jnp.exp(s - m)
        denom = jnp.sum(p, axis=-1, keepdims=True)
        attn = p * pl.reciprocal(denom, approx=False)   # EUP recip + VPU mul

        pv_lhs = attn.astype(jnp.bfloat16) if mxu_bf16 else attn
        pv_rhs = v_h.astype(jnp.bfloat16) if mxu_bf16 else v_h
        ctx = jnp.dot(pv_lhs, pv_rhs, preferred_element_type=jnp.float32)  # (T, D)

        attn_ref[h, 0] = attn.astype(attn_ref.dtype)
        ctx_ref[0, :, h * D:(h + 1) * D] = ctx.astype(ctx_ref.dtype)


def attention_core(qh, kh, vh, *, scale, mxu_bf16):
    """qh/kh/vh: (B, T, H, D). Returns context (B, T, H*D), attn (H, B, T, T)."""
    B, T, H, D = qh.shape
    E = H * D
    kernel = functools.partial(_mha_kernel, scale=scale, num_heads=H,
                               head_dim=D, mxu_bf16=mxu_bf16)
    qkv_spec = pl.BlockSpec((1, T, H, D), lambda b: (b, 0, 0, 0))
    ctx, attn = pl.pallas_call(
        kernel,
        grid=(B,),
        in_specs=[qkv_spec, qkv_spec, qkv_spec],
        out_specs=(
            pl.BlockSpec((1, T, E), lambda b: (b, 0, 0)),        # lane-dense ctx
            pl.BlockSpec((H, 1, T, T), lambda b: (0, b, 0, 0)),  # head-major attn
        ),
        out_shape=(
            jax.ShapeDtypeStruct((B, T, E), jnp.float32),
            jax.ShapeDtypeStruct((H, B, T, T), jnp.float32),
        ),
        compiler_params=pltpu.CompilerParams(
            dimension_semantics=("parallel",)),
    )(qh, kh, vh)
    return ctx, attn


# ----------------------------------------------------------------------------
# Module wrapper (parameter setup + free reshapes only)
# ----------------------------------------------------------------------------
class AttentionPallas:
    def __init__(self, attention_dimension: int, attention_heads: int, key,
                 mxu_bf16: bool = True):
        assert attention_dimension % attention_heads == 0, \
            "Attention dimension and head size must be divisible!"
        self.num_heads = attention_heads
        self.div_dimension = attention_dimension // attention_heads
        self.mxu_bf16 = mxu_bf16

        bound = 1.0 / math.sqrt(attention_dimension)   # PyTorch nn.Linear bound
        kw, kb = jax.random.split(key)
        # Only the query projection is ever used in the reference forward pass.
        self.wq = jax.random.uniform(
            kw, (attention_dimension, attention_dimension), jnp.float32, -bound, bound)
        self.bq = jax.random.uniform(
            kb, (attention_dimension,), jnp.float32, -bound, bound)
        # Pre-transpose (and optionally pre-cast) the weight ONCE; the forward
        # pass never materializes w.T again.
        w_t = self.wq.T
        self.wq_t = w_t.astype(jnp.bfloat16) if mxu_bf16 else w_t
        self.bq_row = self.bq.reshape(1, attention_dimension)

    def __call__(self, query, key, value, mask=None):
        # TODO(synk): optional `mask` branch (masked_fill with -inf) not implemented.
        assert mask is None
        B, T, _ = query.shape
        H, D = self.num_heads, self.div_dimension

        # Same (query) projection applied to q, k, v — as in the reference module.
        q, k, v = fused_qkv_projection(query, key, value, self.wq_t, self.bq_row,
                                       mxu_bf16=self.mxu_bf16)

        # Free reshapes only — the per-head gather is done by the BlockSpec DMA.
        qh = q.reshape(B, T, H, D)
        kh = k.reshape(B, T, H, D)
        vh = v.reshape(B, T, H, D)

        ctx, attn = attention_core(qh, kh, vh,
                                   scale=1.0 / math.sqrt(D),
                                   mxu_bf16=self.mxu_bf16)
        # ctx is already (B, T, H*D); attn (H, B, T, T) flattens head-major,
        # matching the reference's (num_heads * batch, T, T) ordering.
        return ctx, attn.reshape(H * B, T, T)


# ----------------------------------------------------------------------------
# Pure-JAX reference (mirrors the PyTorch forward exactly) for validation
# ----------------------------------------------------------------------------
def reference_forward(mod, query, key, value):
    B = value.shape[0]
    H, D = mod.num_heads, mod.div_dimension
    proj = lambda x: x @ mod.wq.T + mod.bq
    q, k, v = proj(query), proj(key), proj(value)
    heads = lambda x: x.reshape(B, -1, H, D).transpose(2, 0, 1, 3).reshape(H * B, -1, D)
    qh, kh, vh = heads(q), heads(k), heads(v)
    s = jnp.einsum("btd,bsd->bts", qh, kh) / math.sqrt(D)
    a = jax.nn.softmax(s, axis=-1)
    c = jnp.einsum("bts,bsd->btd", a, vh)
    T = c.shape[1]
    c = c.reshape(H, B, T, D).transpose(1, 2, 0, 3).reshape(B, T, H * D)
    return c, a


if __name__ == "__main__":
    B, T, E, H = 2, 8, 32, 4  # batch, tokens, hidden (attention_dimension), heads

    root = jax.random.PRNGKey(0)
    kq, kk, kv, kp = jax.random.split(root, 4)
    query = jax.random.normal(kq, (B, T, E), jnp.float32)
    key_t = jax.random.normal(kk, (B, T, E), jnp.float32)
    value = jax.random.normal(kv, (B, T, E), jnp.float32)

    # --- f32 MXU path: tight check against the pure-JAX reference -----------
    mod_f32 = AttentionPallas(attention_dimension=E, attention_heads=H,
                              key=kp, mxu_bf16=False)
    ctx32, attn32 = mod_f32(query, key_t, value)
    ctx32 = jax.block_until_ready(ctx32)
    attn32 = jax.block_until_ready(attn32)

    ref_ctx, ref_attn = reference_forward(mod_f32, query, key_t, value)
    assert ctx32.shape == (B, T, E)
    assert attn32.shape == (B * H, T, T)
    assert jnp.allclose(ctx32, ref_ctx, rtol=1e-5, atol=1e-5)
    assert jnp.allclose(attn32, ref_attn, rtol=1e-5, atol=1e-5)

    # --- bf16-MXU path (default perf path): loosened tolerance --------------
    mod_bf16 = AttentionPallas(attention_dimension=E, attention_heads=H,
                               key=kp, mxu_bf16=True)
    ctxb, attnb = mod_bf16(query, key_t, value)
    ctxb = jax.block_until_ready(ctxb)
    attnb = jax.block_until_ready(attnb)
    assert ctxb.shape == (B, T, E)
    assert attnb.shape == (B * H, T, T)
    assert jnp.allclose(ctxb, ref_ctx, rtol=5e-2, atol=5e-2)
    assert jnp.allclose(attnb, ref_attn, rtol=5e-2, atol=5e-2)

    print("KERNEL_OK")
</pallas_src>

<mosaic_0001>
module attributes {stable_mosaic.version = 11 : i64} {
  func.func @_qkv_proj_kernel(%arg0: i32, %arg1: memref<16x32xf32, #tpu.memory_space<vmem>>, %arg2: memref<16x32xf32, #tpu.memory_space<vmem>>, %arg3: memref<16x32xf32, #tpu.memory_space<vmem>>, %arg4: memref<32x32xf32, #tpu.memory_space<vmem>>, %arg5: memref<1x32xf32, #tpu.memory_space<vmem>>, %arg6: memref<16x32xf32, #tpu.memory_space<vmem>>, %arg7: memref<16x32xf32, #tpu.memory_space<vmem>>, %arg8: memref<16x32xf32, #tpu.memory_space<vmem>>) attributes {dimension_semantics = [#tpu.dimension_semantics<parallel>], iteration_bounds = array<i64: 1>, scalar_prefetch = 0 : i64, scratch_operands = 0 : i64, tpu.core_type = #tpu.core_type<tc>, window_params = [{transform_indices = @transform_0, window_bounds = array<i64: 16, 32>}, {transform_indices = @transform_1, window_bounds = array<i64: 16, 32>}, {transform_indices = @transform_2, window_bounds = array<i64: 16, 32>}, {pipeline_mode = #tpu.pipeline_mode<synchronous>, transform_indices = @transform_3, window_bounds = array<i64: 32, 32>}, {pipeline_mode = #tpu.pipeline_mode<synchronous>, transform_indices = @transform_4, window_bounds = array<i64: 1, 32>}, {transform_indices = @transform_5, window_bounds = array<i64: 16, 32>}, {transform_indices = @transform_6, window_bounds = array<i64: 16, 32>}, {transform_indices = @transform_7, window_bounds = array<i64: 16, 32>}]} {
    %c0 = arith.constant 0 : index
    %c0_0 = arith.constant 0 : index
    %0 = vector.load %arg4[%c0, %c0_0] : memref<32x32xf32, #tpu.memory_space<vmem>>, vector<32x32xf32>
    %c0_1 = arith.constant 0 : index
    %c0_2 = arith.constant 0 : index
    %1 = vector.load %arg5[%c0_1, %c0_2] : memref<1x32xf32, #tpu.memory_space<vmem>>, vector<1x32xf32>
    %c0_3 = arith.constant 0 : index
    %c0_4 = arith.constant 0 : index
    %2 = vector.load %arg1[%c0_3, %c0_4] : memref<16x32xf32, #tpu.memory_space<vmem>>, vector<16x32xf32>
    %cst = arith.constant dense<0.000000e+00> : vector<16x32xf32>
    %3 = tpu.matmul %2, %0, %cst {dimension_numbers = #tpu.dot_dimension_numbers<[1], [0], [0], [1], [0, 0, 1, 1], [], []>} : vector<16x32xf32>, vector<32x32xf32>, vector<16x32xf32> -> vector<16x32xf32>
    %4 = vector.broadcast %1 : vector<1x32xf32> to vector<16x32xf32>
    %5 = arith.addf %3, %4 : vector<16x32xf32>
    %c0_5 = arith.constant 0 : index
    %c0_6 = arith.constant 0 : index
    %6 = vector.load %arg6[%c0_5, %c0_6] : memref<16x32xf32, #tpu.memory_space<vmem>>, vector<16x32xf32>
    tpu.vector_store %arg6[%c0_5, %c0_6], %5 {strides = array<i32>} : memref<16x32xf32, #tpu.memory_space<vmem>>, vector<16x32xf32>,
    %c0_7 = arith.constant 0 : index
    %c0_8 = arith.constant 0 : index
    %7 = vector.load %arg2[%c0_7, %c0_8] : memref<16x32xf32, #tpu.memory_space<vmem>>, vector<16x32xf32>
    %cst_9 = arith.constant dense<0.000000e+00> : vector<16x32xf32>
    %8 = tpu.matmul %7, %0, %cst_9 {dimension_numbers = #tpu.dot_dimension_numbers<[1], [0], [0], [1], [0, 0, 1, 1], [], []>} : vector<16x32xf32>, vector<32x32xf32>, vector<16x32xf32> -> vector<16x32xf32>
    %9 = vector.broadcast %1 : vector<1x32xf32> to vector<16x32xf32>
    %10 = arith.addf %8, %9 : vector<16x32xf32>
    %c0_10 = arith.constant 0 : index
    %c0_11 = arith.constant 0 : index
    %11 = vector.load %arg7[%c0_10, %c0_11] : memref<16x32xf32, #tpu.memory_space<vmem>>, vector<16x32xf32>
    tpu.vector_store %arg7[%c0_10, %c0_11], %10 {strides = array<i32>} : memref<16x32xf32, #tpu.memory_space<vmem>>, vector<16x32xf32>,
    %c0_12 = arith.constant 0 : index
    %c0_13 = arith.constant 0 : index
    %12 = vector.load %arg3[%c0_12, %c0_13] : memref<16x32xf32, #tpu.memory_space<vmem>>, vector<16x32xf32>
    %cst_14 = arith.constant dense<0.000000e+00> : vector<16x32xf32>
    %13 = tpu.matmul %12, %0, %cst_14 {dimension_numbers = #tpu.dot_dimension_numbers<[1], [0], [0], [1], [0, 0, 1, 1], [], []>} : vector<16x32xf32>, vector<32x32xf32>, vector<16x32xf32> -> vector<16x32xf32>
    %14 = vector.broadcast %1 : vector<1x32xf32> to vector<16x32xf32>
    %15 = arith.addf %13, %14 : vector<16x32xf32>
    %c0_15 = arith.constant 0 : index
    %c0_16 = arith.constant 0 : index
    %16 = vector.load %arg8[%c0_15, %c0_16] : memref<16x32xf32, #tpu.memory_space<vmem>>, vector<16x32xf32>
    tpu.vector_store %arg8[%c0_15, %c0_16], %15 {strides = array<i32>} : memref<16x32xf32, #tpu.memory_space<vmem>>, vector<16x32xf32>,
    return
  }
  func.func @transform_0(%arg0: i32) -> (i32, i32) {
    %c0_i32 = arith.constant 0 : i32
    %c0_i32_0 = arith.constant 0 : i32
    return %arg0, %c0_i32 : i32, i32
  }
  func.func @transform_1(%arg0: i32) -> (i32, i32) {
    %c0_i32 = arith.constant 0 : i32
    %c0_i32_0 = arith.constant 0 : i32
    return %arg0, %c0_i32 : i32, i32
  }
  func.func @transform_2(%arg0: i32) -> (i32, i32) {
    %c0_i32 = arith.constant 0 : i32
    %c0_i32_0 = arith.constant 0 : i32
    return %arg0, %c0_i32 : i32, i32
  }
  func.func @transform_3(%arg0: i32) -> (i32, i32) {
    %c0_i32 = arith.constant 0 : i32
    %c0_i32_0 = arith.constant 0 : i32
    %c0_i32_1 = arith.constant 0 : i32
    return %c0_i32, %c0_i32_0 : i32, i32
  }
  func.func @transform_4(%arg0: i32) -> (i32, i32) {
    %c0_i32 = arith.constant 0 : i32
    %c0_i32_0 = arith.constant 0 : i32
    %c0_i32_1 = arith.constant 0 : i32
    return %c0_i32, %c0_i32_0 : i32, i32
  }
  func.func @transform_5(%arg0: i32) -> (i32, i32) {
    %c0_i32 = arith.constant 0 : i32
    %c0_i32_0 = arith.constant 0 : i32
    return %arg0, %c0_i32 : i32, i32
  }
  func.func @transform_6(%arg0: i32) -> (i32, i32) {
    %c0_i32 = arith.constant 0 : i32
    %c0_i32_0 = arith.constant 0 : i32
    return %arg0, %c0_i32 : i32, i32
  }
  func.func @transform_7(%arg0: i32) -> (i32, i32) {
    %c0_i32 = arith.constant 0 : i32
    %c0_i32_0 = arith.constant 0 : i32
    return %arg0, %c0_i32 : i32, i32
  }
}

</mosaic_0001>

<llo_original>
// kernel: tpu_custom_call.1
$region0: #{tpu_custom_call.1}
  #allocation0 [shape = 'u32[]', space=smem, size = 0x4, offset = 0x4, fixed_abs, tag = 'smem constant byte address 0x4 - core index']
  #allocation1 [shape = 'u32[144,128]{1,0:T(1,128)}', space=vmem, size = 0x12000, scoped, tag = 'internal scratch']
  %s0 = inlined_call_operand.hbm [shape: f32[16,32], index: 0, kind: input, shape index: {}]
  %s1 = inlined_call_operand.hbm [shape: f32[16,32], index: 1, kind: input, shape index: {}]
  %s2 = inlined_call_operand.hbm [shape: f32[16,32], index: 2, kind: input, shape index: {}]
  %s3 = inlined_call_operand.hbm [shape: f32[32,32], index: 3, kind: input, shape index: {}]
  %s4 = inlined_call_operand.vmem [shape: f32[1,32], index: 4, kind: input, shape index: {}]
  %s5 = inlined_call_operand.hbm [shape: f32[16,32], index: 5, kind: output, shape index: {0}]
  %s6 = inlined_call_operand.hbm [shape: f32[16,32], index: 6, kind: output, shape index: {1}]
  %s7 = inlined_call_operand.hbm [shape: f32[16,32], index: 7, kind: output, shape index: {2}]
  %8 = xla_tuple %s5, %s6, %s7
  %s9 = sld [smem:[#allocation0]]
  $region62: #{tpu_custom_call.1} parent=0
    _
  %s11 = ssub.s32 1, %s9
  %s12 = scalar_select 0, %s11, %s9
  $region1: #{tpu_custom_call.1} parent=0
    #allocation2 [shape = 'u8[8192]{0}', space=vmem, size = 0x2000, scoped, tag = 'input window, operand 0, single buffered']
    #allocation3 [shape = 's32[1]{0}', space=sflag, size = 0x4, scoped, tag = 'scoped memory for tpu_custom_call.1']
    #allocation4 [shape = 's32[1]{0}', space=sflag, size = 0x4, scoped, tag = 'scoped memory for tpu_custom_call.1']
    #allocation5 [shape = 'u8[8192]{0}', space=vmem, size = 0x2000, scoped, tag = 'input window, operand 1, single buffered']
    #allocation6 [shape = 's32[1]{0}', space=sflag, size = 0x4, scoped, tag = 'scoped memory for tpu_custom_call.1']
    #allocation7 [shape = 'u8[8192]{0}', space=vmem, size = 0x2000, scoped, tag = 'input window, operand 2, single buffered']
    #allocation8 [shape = 'u8[16384]{0}', space=vmem, size = 0x4000, scoped, tag = 'input window, operand 3, single buffered']
    #allocation9 [shape = 's32[1]{0}', space=sflag, size = 0x4, scoped, tag = 'scoped memory for tpu_custom_call.1']
    #allocation10 [shape = 'u8[8192]{0}', space=vmem, size = 0x2000, scoped, tag = 'output window, operand 0, single buffered']
    #allocation11 [shape = 'u8[8192]{0}', space=vmem, size = 0x2000, scoped, tag = 'output window, operand 1, single buffered']
    #allocation12 [shape = 's32[1]{0}', space=sflag, size = 0x4, scoped, tag = 'scoped memory for tpu_custom_call.1']
    #allocation13 [shape = 'u8[8192]{0}', space=vmem, size = 0x2000, scoped, tag = 'output window, operand 2, single buffered']
    %13 = vsyncpa [#allocation3], 0
    %14 = vsyncpa [#allocation6], 0
    %15 = vsyncpa [#allocation9], 0
    %16 = vsyncpa [#allocation4], 0
    %17 = vsyncpa [#allocation12], 0
    // Predicated region
    $region2: #{tpu_custom_call.1} parent=1 // pred_check
      _
    $region3: #{tpu_custom_call.1} parent=1 // pred_check_branch
      %19 = sbr.rel (0) target = $region5
    $region4: #{tpu_custom_call.1} parent=1 // pred_region
      %s21 = ssub.s32 256, 256
      %22 = vsyncadd [#allocation3], %s21
      %s23 = sshll.u32 [#allocation2], 4
      %s24 = int_to_ptr.vmem [resolvable:$true] %s23
      %29 = dma.hbm_to_vmem [thread:$0]  %s0, 256, %s24, [#allocation3], 128, 128, 8
    $region5: #{tpu_custom_call.1} parent=1 // pred_fallthru
      _
    // Predicated region
    $region6: #{tpu_custom_call.1} parent=1 // pred_check
      _
    $region7: #{tpu_custom_call.1} parent=1 // pred_check_branch
      %31 = sbr.rel (0) target = $region9
    $region8: #{tpu_custom_call.1} parent=1 // pred_region
      %s33 = ssub.s32 256, 256
      %34 = vsyncadd [#allocation6], %s33
      %s35 = sshll.u32 [#allocation5], 4
      %s36 = int_to_ptr.vmem [resolvable:$true] %s35
      %41 = dma.hbm_to_vmem [thread:$0]  %s1, 256, %s36, [#allocation6], 128, 128, 8
    $region9: #{tpu_custom_call.1} parent=1 // pred_fallthru
      _
    // Predicated region
    $region10: #{tpu_custom_call.1} parent=1 // pred_check
      _
    $region11: #{tpu_custom_call.1} parent=1 // pred_check_branch
      %43 = sbr.rel (0) target = $region13
    $region12: #{tpu_custom_call.1} parent=1 // pred_region
      %s45 = ssub.s32 256, 256
      %46 = vsyncadd [#allocation6], %s45
      %s47 = sshll.u32 [#allocation7], 4
      %s48 = int_to_ptr.vmem [resolvable:$true] %s47
      %53 = dma.hbm_to_vmem [thread:$0]  %s2, 256, %s48, [#allocation6], 128, 128, 8
    $region13: #{tpu_custom_call.1} parent=1 // pred_fallthru
      _
    // Predicated region
    $region14: #{tpu_custom_call.1} parent=1 // pred_check
      _
    $region15: #{tpu_custom_call.1} parent=1 // pred_check_branch
      %55 = sbr.rel (0) target = $region17
    $region16: #{tpu_custom_call.1} parent=1 // pred_region
      %s57 = ssub.s32 512, 512
      %58 = vsyncadd [#allocation9], %s57
      %s59 = sshll.u32 [#allocation8], 4
      %s60 = int_to_ptr.vmem [resolvable:$true] %s59
      %65 = dma.hbm_to_vmem [thread:$0]  %s3, 512, %s60, [#allocation9], 128, 128, 8
    $region17: #{tpu_custom_call.1} parent=1 // pred_fallthru
      _
    // Predicated region
    $region18: #{tpu_custom_call.1} parent=1 // pred_check
      _
    $region19: #{tpu_custom_call.1} parent=1 // pred_check_branch
      %67 = sbr.rel (0) target = $region21
    $region20: #{tpu_custom_call.1} parent=1 // pred_region
      _
    $region21: #{tpu_custom_call.1} parent=1 // pred_fallthru
      _
    // Predicated region
    $region22: #{tpu_custom_call.1} parent=1 // pred_check
      _
    $region23: #{tpu_custom_call.1} parent=1 // pred_check_branch
      %69 = sbr.rel (0) target = $region25
    $region24: #{tpu_custom_call.1} parent=1 // pred_region
      %70 = dma.done [#allocation3], 256
    $region25: #{tpu_custom_call.1} parent=1 // pred_fallthru
      _
    // Predicated region
    $region26: #{tpu_custom_call.1} parent=1 // pred_check
      _
    $region27: #{tpu_custom_call.1} parent=1 // pred_check_branch
      %72 = sbr.rel (0) target = $region29
    $region28: #{tpu_custom_call.1} parent=1 // pred_region
      %73 = dma.done [#allocation6], 256
    $region29: #{tpu_custom_call.1} parent=1 // pred_fallthru
      _
    // Predicated region
    $region30: #{tpu_custom_call.1} parent=1 // pred_check
      _
    $region31: #{tpu_custom_call.1} parent=1 // pred_check_branch
      %75 = sbr.rel (0) target = $region33
    $region32: #{tpu_custom_call.1} parent=1 // pred_region
      %76 = dma.done [#allocation6], 256
    $region33: #{tpu_custom_call.1} parent=1 // pred_fallthru
      _
    // Predicated region
    $region34: #{tpu_custom_call.1} parent=1 // pred_check
      _
    $region35: #{tpu_custom_call.1} parent=1 // pred_check_branch
      %78 = sbr.rel (0) target = $region37
    $region36: #{tpu_custom_call.1} parent=1 // pred_region
      %79 = dma.done [#allocation9], 512
    $region37: #{tpu_custom_call.1} parent=1 // pred_fallthru
      _
    %v80 = vld [vmem:[#allocation8] sm:$0xff]
    %v81 = vld [vmem:[#allocation8 + $0x8] sm:$0xff]
    %v82 = vld [vmem:[#allocation8 + $0x10] sm:$0xff]
    %v83 = vld [vmem:[#allocation8 + $0x18] sm:$0xff]
    %v84 = vld [vmem:[%s4] sm:$0x1]
    %v85 = vld [vmem:[#allocation2] sm:$0xff]
    %v86 = vld [vmem:[#allocation2 + $0x8] sm:$0xff]
    %v88 = vlaneseq
    %v89 = vshrl.u32 %v88, 7
    %v90 = vsub.s32 0, %v89
    %v91 = vrot.slane %v84, %v90
    %vm93 = vcmask 261120
    %v95 = vsel %vm93, %v85, 0
    %v98 = vsel %vm93, %v86, 0
    %100 = vmatprep.subr.mxu0 0.0
    %101 = vmatpush1.msra.mxu0 %v80
    %102 = vmatprep.subr.mxu0 0.0
    %103 = vmatpush1.msra.mxu0 %v81
    %104 = vmatprep.subr.mxu0 0.0
    %105 = vmatpush1.msra.mxu0 %v82
    %106 = vmatprep.subr.mxu0 0.0
    %107 = vmatpush1.msra.mxu0 %v83
    %108 = vmatprep.subr.mxu0 0.0
    %109 = vmatpush1.msra.mxu0 0.0
    %110 = vmatprep.subr.mxu0 0.0
    %111 = vmatpush1.msra.mxu0 0.0
    %112 = vmatprep.subr.mxu0 0.0
    %113 = vmatpush1.msra.mxu0 0.0
    %114 = vmatprep.subr.mxu0 0.0
    %115 = vmatpush1.msra.mxu0 0.0
    %116 = vmatprep.subr.mxu0 0.0
    %117 = vmatpush1.msra.mxu0 0.0
    %118 = vmatprep.subr.mxu0 0.0
    %119 = vmatpush1.msra.mxu0 0.0
    %120 = vmatprep.subr.mxu0 0.0
    %121 = vmatpush1.msra.mxu0 0.0
    %122 = vmatprep.subr.mxu0 0.0
    %123 = vmatpush1.msra.mxu0 0.0
    %124 = vmatprep.subr.mxu0 0.0
    %125 = vmatpush1.msra.mxu0 0.0
    %126 = vmatprep.subr.mxu0 0.0
    %127 = vmatpush1.msra.mxu0 0.0
    %128 = vmatprep.subr.mxu0 0.0
    %129 = vmatpush1.msra.mxu0 0.0
    %130 = vmatprep.subr.mxu0 0.0
    %131 = vmatpush1.msra.mxu0 0.0
    %132 = vmatprep.subr.mxu0 0.0
    %133 = vmatpush1.msra.mxu0 0.0
    %134 = vmatprep.subr.mxu0 0.0
    %135 = vmatpush1.msra.mxu0 0.0
    %136 = vmatprep.subr.mxu0 0.0
    %137 = vmatpush1.msra.mxu0 0.0
    %138 = vmatprep.subr.mxu0 0.0
    %139 = vmatpush1.msra.mxu0 0.0
    %140 = vmatprep.subr.mxu0 0.0
    %141 = vmatpush1.msra.mxu0 0.0
    %142 = vmatprep.subr.mxu0 0.0
    %143 = vmatpush1.msra.mxu0 0.0
    %144 = vmatprep.subr.mxu0 0.0
    %145 = vmatpush1.msra.mxu0 0.0
    %146 = vmatprep.subr.mxu0 0.0
    %147 = vmatpush1.msra.mxu0 0.0
    %148 = vmatprep.subr.mxu0 0.0
    %149 = vmatpush1.msra.mxu0 0.0
    %150 = vmatprep.subr.mxu0 0.0
    %151 = vmatpush1.msra.mxu0 0.0
    %152 = vmatprep.subr.mxu0 0.0
    %153 = vmatpush1.msra.mxu0 0.0
    %154 = vmatprep.subr.mxu0 0.0
    %155 = vmatpush1.msra.mxu0 0.0
    %156 = vmatprep.subr.mxu0 0.0
    %157 = vmatpush1.msra.mxu0 0.0
    %158 = vmatprep.subr.mxu0 0.0
    %159 = vmatpush1.msra.mxu0 0.0
    %160 = vmatprep.subr.mxu0 0.0
    %161 = vmatpush1.msra.mxu0 0.0
    %162 = vmatprep.subr.mxu0 0.0
    %163 = vmatpush1.msra.mxu0 0.0
    %164 = vmatprep.mubr.f32.mxu0 0.0
    %165 = vmatmul.mubr.f32.gmra.mrb[0].mxu0 %v95
    %v166 = vpop.f32.mrb[0].mxu0
    %v167 = vadd.f32 %v91, %v166
    %v168 = vpop.f32.mrb[0].mxu0
    %169 = vmatprep.mubr.f32.mxu0 0.0
    %170 = vmatmul.mubr.f32.gmra.mrb[0].mxu0 %v98
    %v171 = vpop.f32.mrb[0].mxu0
    %v172 = vadd.f32 %v91, %v171
    %v173 = vpop.f32.mrb[0].mxu0
    %174 = vdwg.mxu0
    %175 = vst.msk [vmem:[#allocation10] sm:$0xff] %vm93, %v167
    %176 = vst.msk [vmem:[#allocation10 + $0x8] sm:$0xff] %vm93, %v172
    %v177 = vld [vmem:[#allocation5] sm:$0xff]
    %v178 = vld [vmem:[#allocation5 + $0x8] sm:$0xff]
    %v180 = vsel %vm93, %v177, 0
    %v183 = vsel %vm93, %v178, 0
    %185 = vmatprep.subr.mxu0 0.0
    %186 = vmatpush1.msra.mxu0 %v80
    %187 = vmatprep.subr.mxu0 0.0
    %188 = vmatpush1.msra.mxu0 %v81
    %189 = vmatprep.subr.mxu0 0.0
    %190 = vmatpush1.msra.mxu0 %v82
    %191 = vmatprep.subr.mxu0 0.0
    %192 = vmatpush1.msra.mxu0 %v83
    %193 = vmatprep.subr.mxu0 0.0
    %194 = vmatpush1.msra.mxu0 0.0
    %195 = vmatprep.subr.mxu0 0.0
    %196 = vmatpush1.msra.mxu0 0.0
    %197 = vmatprep.subr.mxu0 0.0
    %198 = vmatpush1.msra.mxu0 0.0
    %199 = vmatprep.subr.mxu0 0.0
    %200 = vmatpush1.msra.mxu0 0.0
    %201 = vmatprep.subr.mxu0 0.0
    %202 = vmatpush1.msra.mxu0 0.0
    %203 = vmatprep.subr.mxu0 0.0
    %204 = vmatpush1.msra.mxu0 0.0
    %205 = vmatprep.subr.mxu0 0.0
    %206 = vmatpush1.msra.mxu0 0.0
    %207 = vmatprep.subr.mxu0 0.0
    %208 = vmatpush1.msra.mxu0 0.0
    %209 = vmatprep.subr.mxu0 0.0
    %210 = vmatpush1.msra.mxu0 0.0
    %211 = vmatprep.subr.mxu0 0.0
    %212 = vmatpush1.msra.mxu0 0.0
    %213 = vmatprep.subr.mxu0 0.0
    %214 = vmatpush1.msra.mxu0 0.0
    %215 = vmatprep.subr.mxu0 0.0
    %216 = vmatpush1.msra.mxu0 0.0
    %217 = vmatprep.subr.mxu0 0.0
    %218 = vmatpush1.msra.mxu0 0.0
    %219 = vmatprep.subr.mxu0 0.0
    %220 = vmatpush1.msra.mxu0 0.0
    %221 = vmatprep.subr.mxu0 0.0
    %222 = vmatpush1.msra.mxu0 0.0
    %223 = vmatprep.subr.mxu0 0.0
    %224 = vmatpush1.msra.mxu0 0.0
    %225 = vmatprep.subr.mxu0 0.0
    %226 = vmatpush1.msra.mxu0 0.0
    %227 = vmatprep.subr.mxu0 0.0
    %228 = vmatpush1.msra.mxu0 0.0
    %229 = vmatprep.subr.mxu0 0.0
    %230 = vmatpush1.msra.mxu0 0.0
    %231 = vmatprep.subr.mxu0 0.0
    %232 = vmatpush1.msra.mxu0 0.0
    %233 = vmatprep.subr.mxu0 0.0
    %234 = vmatpush1.msra.mxu0 0.0
    %235 = vmatprep.subr.mxu0 0.0
    %236 = vmatpush1.msra.mxu0 0.0
    %237 = vmatprep.subr.mxu0 0.0
    %238 = vmatpush1.msra.mxu0 0.0
    %239 = vmatprep.subr.mxu0 0.0
    %240 = vmatpush1.msra.mxu0 0.0
    %241 = vmatprep.subr.mxu0 0.0
    %242 = vmatpush1.msra.mxu0 0.0
    %243 = vmatprep.subr.mxu0 0.0
    %244 = vmatpush1.msra.mxu0 0.0
    %245 = vmatprep.subr.mxu0 0.0
    %246 = vmatpush1.msra.mxu0 0.0
    %247 = vmatprep.subr.mxu0 0.0
    %248 = vmatpush1.msra.mxu0 0.0
    %249 = vmatprep.mubr.f32.mxu0 0.0
    %250 = vmatmul.mubr.f32.gmra.mrb[0].mxu0 %v180
    %v251 = vpop.f32.mrb[0].mxu0
    %v252 = vadd.f32 %v91, %v251
    %v253 = vpop.f32.mrb[0].mxu0
    %254 = vmatprep.mubr.f32.mxu0 0.0
    %255 = vmatmul.mubr.f32.gmra.mrb[0].mxu0 %v183
    %v256 = vpop.f32.mrb[0].mxu0
    %v257 = vadd.f32 %v91, %v256
    %v258 = vpop.f32.mrb[0].mxu0
    %259 = vdwg.mxu0
    %260 = vst.msk [vmem:[#allocation11] sm:$0xff] %vm93, %v252
    %261 = vst.msk [vmem:[#allocation11 + $0x8] sm:$0xff] %vm93, %v257
    %v262 = vld [vmem:[#allocation7] sm:$0xff]
    %v263 = vld [vmem:[#allocation7 + $0x8] sm:$0xff]
    %v265 = vsel %vm93, %v262, 0
    %v268 = vsel %vm93, %v263, 0
    %270 = vmatprep.subr.mxu0 0.0
    %271 = vmatpush1.msra.mxu0 %v80
    %272 = vmatprep.subr.mxu0 0.0
    %273 = vmatpush1.msra.mxu0 %v81
    %274 = vmatprep.subr.mxu0 0.0
    %275 = vmatpush1.msra.mxu0 %v82
    %276 = vmatprep.subr.mxu0 0.0
    %277 = vmatpush1.msra.mxu0 %v83
    %278 = vmatprep.subr.mxu0 0.0
    %279 = vmatpush1.msra.mxu0 0.0
    %280 = vmatprep.subr.mxu0 0.0
    %281 = vmatpush1.msra.mxu0 0.0
    %282 = vmatprep.subr.mxu0 0.0
    %283 = vmatpush1.msra.mxu0 0.0
    %284 = vmatprep.subr.mxu0 0.0
    %285 = vmatpush1.msra.mxu0 0.0
    %286 = vmatprep.subr.mxu0 0.0
    %287 = vmatpush1.msra.mxu0 0.0
    %288 = vmatprep.subr.mxu0 0.0
    %289 = vmatpush1.msra.mxu0 0.0
    %290 = vmatprep.subr.mxu0 0.0
    %291 = vmatpush1.msra.mxu0 0.0
    %292 = vmatprep.subr.mxu0 0.0
    %293 = vmatpush1.msra.mxu0 0.0
    %294 = vmatprep.subr.mxu0 0.0
    %295 = vmatpush1.msra.mxu0 0.0
    %296 = vmatprep.subr.mxu0 0.0
    %297 = vmatpush1.msra.mxu0 0.0
    %298 = vmatprep.subr.mxu0 0.0
    %299 = vmatpush1.msra.mxu0 0.0
    %300 = vmatprep.subr.mxu0 0.0
    %301 = vmatpush1.msra.mxu0 0.0
    %302 = vmatprep.subr.mxu0 0.0
    %303 = vmatpush1.msra.mxu0 0.0
    %304 = vmatprep.subr.mxu0 0.0
    %305 = vmatpush1.msra.mxu0 0.0
    %306 = vmatprep.subr.mxu0 0.0
    %307 = vmatpush1.msra.mxu0 0.0
    %308 = vmatprep.subr.mxu0 0.0
    %309 = vmatpush1.msra.mxu0 0.0
    %310 = vmatprep.subr.mxu0 0.0
    %311 = vmatpush1.msra.mxu0 0.0
    %312 = vmatprep.subr.mxu0 0.0
    %313 = vmatpush1.msra.mxu0 0.0
    %314 = vmatprep.subr.mxu0 0.0
    %315 = vmatpush1.msra.mxu0 0.0
    %316 = vmatprep.subr.mxu0 0.0
    %317 = vmatpush1.msra.mxu0 0.0
    %318 = vmatprep.subr.mxu0 0.0
    %319 = vmatpush1.msra.mxu0 0.0
    %320 = vmatprep.subr.mxu0 0.0
    %321 = vmatpush1.msra.mxu0 0.0
    %322 = vmatprep.subr.mxu0 0.0
    %323 = vmatpush1.msra.mxu0 0.0
    %324 = vmatprep.subr.mxu0 0.0
    %325 = vmatpush1.msra.mxu0 0.0
    %326 = vmatprep.subr.mxu0 0.0
    %327 = vmatpush1.msra.mxu0 0.0
    %328 = vmatprep.subr.mxu0 0.0
    %329 = vmatpush1.msra.mxu0 0.0
    %330 = vmatprep.subr.mxu0 0.0
    %331 = vmatpush1.msra.mxu0 0.0
    %332 = vmatprep.subr.mxu0 0.0
    %333 = vmatpush1.msra.mxu0 0.0
    %334 = vmatprep.mubr.f32.mxu0 0.0
    %335 = vmatmul.mubr.f32.gmra.mrb[0].mxu0 %v265
    %v336 = vpop.f32.mrb[0].mxu0
    %v337 = vadd.f32 %v91, %v336
    %v338 = vpop.f32.mrb[0].mxu0
    %339 = vmatprep.mubr.f32.mxu0 0.0
    %340 = vmatmul.mubr.f32.gmra.mrb[0].mxu0 %v268
    %v341 = vpop.f32.mrb[0].mxu0
    %v342 = vadd.f32 %v91, %v341
    %v343 = vpop.f32.mrb[0].mxu0
    %344 = vdwg.mxu0
    %345 = vst.msk [vmem:[#allocation13] sm:$0xff] %vm93, %v337
    %346 = vst.msk [vmem:[#allocation13 + $0x8] sm:$0xff] %vm93, %v342
    // Predicated region
    $region38: #{tpu_custom_call.1} parent=1 // pred_check
      _
    $region39: #{tpu_custom_call.1} parent=1 // pred_check_branch
      %348 = sbr.rel (0) target = $region41
    $region40: #{tpu_custom_call.1} parent=1 // pred_region
      %s350 = ssub.s32 256, 256
      %351 = vsyncadd [#allocation4], %s350
      %s352 = sshll.u32 [#allocation10], 4
      %s353 = int_to_ptr.vmem [resolvable:$true] %s352
      %358 = dma.vmem_to_hbm [thread:$0]  %s353, 256, %s5, [#allocation4], 128, 128, 8
    $region41: #{tpu_custom_call.1} parent=1 // pred_fallthru
      _
    // Predicated region
    $region42: #{tpu_custom_call.1} parent=1 // pred_check
      _
    $region43: #{tpu_custom_call.1} parent=1 // pred_check_branch
      %360 = sbr.rel (0) target = $region45
    $region44: #{tpu_custom_call.1} parent=1 // pred_region
      %s362 = ssub.s32 256, 256
      %363 = vsyncadd [#allocation12], %s362
      %s364 = sshll.u32 [#allocation11], 4
      %s365 = int_to_ptr.vmem [resolvable:$true] %s364
      %370 = dma.vmem_to_hbm [thread:$0]  %s365, 256, %s6, [#allocation12], 128, 128, 8
    $region45: #{tpu_custom_call.1} parent=1 // pred_fallthru
      _
    // Predicated region
    $region46: #{tpu_custom_call.1} parent=1 // pred_check
      _
    $region47: #{tpu_custom_call.1} parent=1 // pred_check_branch
      %372 = sbr.rel (0) target = $region49
    $region48: #{tpu_custom_call.1} parent=1 // pred_region
      %s374 = ssub.s32 256, 256
      %375 = vsyncadd [#allocation12], %s374
      %s376 = sshll.u32 [#allocation13], 4
      %s377 = int_to_ptr.vmem [resolvable:$true] %s376
      %382 = dma.vmem_to_hbm [thread:$0]  %s377, 256, %s7, [#allocation12], 128, 128, 8
    $region49: #{tpu_custom_call.1} parent=1 // pred_fallthru
      _
    // Predicated region
    $region50: #{tpu_custom_call.1} parent=1 // pred_check
      _
    $region51: #{tpu_custom_call.1} parent=1 // pred_check_branch
      %384 = sbr.rel (0) target = $region53
    $region52: #{tpu_custom_call.1} parent=1 // pred_region
      %385 = dma.done [#allocation4], 256
    $region53: #{tpu_custom_call.1} parent=1 // pred_fallthru
      _
    // Predicated region
    $region54: #{tpu_custom_call.1} parent=1 // pred_check
      _
    $region55: #{tpu_custom_call.1} parent=1 // pred_check_branch
      %387 = sbr.rel (0) target = $region57
    $region56: #{tpu_custom_call.1} parent=1 // pred_region
      %388 = dma.done [#allocation12], 256
    $region57: #{tpu_custom_call.1} parent=1 // pred_fallthru
      _
    // Predicated region
    $region58: #{tpu_custom_call.1} parent=1 // pred_check
      _
    $region59: #{tpu_custom_call.1} parent=1 // pred_check_branch
      %390 = sbr.rel (0) target = $region61
    $region60: #{tpu_custom_call.1} parent=1 // pred_region
      %391 = dma.done [#allocation12], 256
    $region61: #{tpu_custom_call.1} parent=1 // pred_fallthru
      _
    %392 = vsyncpa [#allocation3], 1
    %393 = vsyncpa [#allocation6], 1
    %394 = vsyncpa [#allocation9], 1
    %395 = vsyncpa [#allocation4], 1
    %396 = vsyncpa [#allocation12], 1

</llo_original>
